<compile_context>
chip_gen: v6e
topology: v6e:2x2x1
jax: 0.10.0
libtpu: 0.0.40
codegen_flags: <defaults>
</compile_context>

<pallas_src>
import functools

import jax
import jax.numpy as jnp
import numpy as np
from jax.experimental import pallas as pl
from jax.experimental.pallas import tpu as pltpu

# Conservative explicit-VMEM budget used for tile sizing.  Fits under every
# generation's scoped default (16 MiB v5e, 32 MiB v6e/v7x) without having to
# raise vmem_limit_bytes.
_VMEM_BUDGET_BYTES = 10 * 1024 * 1024


def _round_down_mult(x, m):
    return max(m, (x // m) * m)


# --------------------------------------------------------------------------
# Kernel 1: key projection  keys = enc2d @ wk + (bq + bk)
# Grid: (row tiles "parallel", K tiles "arbitrary").  f32 accumulator in
# VMEM, bf16 store on the last K step.
# --------------------------------------------------------------------------
def _key_proj_kernel(enc_ref, wk_ref, b_ref, keys_ref, acc_ref):
    # enc_ref: (Tr, Tk) f32, wk_ref: (Tk, H) f32, b_ref: (1, H) f32
    # keys_ref: (Tr, H) keys_dtype, acc_ref: (Tr, H) f32 scratch
    k = pl.program_id(1)

    @pl.when(k == 0)
    def _():
        acc_ref[...] = jnp.zeros_like(acc_ref)

    acc_ref[...] += jnp.dot(enc_ref[...], wk_ref[...],
                            preferred_element_type=jnp.float32)

    @pl.when(k == pl.num_programs(1) - 1)
    def _():
        keys_ref[...] = (acc_ref[...] + b_ref[...]).astype(keys_ref.dtype)


def _key_proj_tiles(rows, K, H, keys_bytes):
    """VMEM-budget-driven (row_tile, k_tile)."""
    # K tile: whole K unless the double-buffered (Tk, H) weight panel would
    # eat more than a quarter of the budget; otherwise the largest
    # 128-multiple divisor of K that fits (keeps the contraction exact —
    # ragged K blocks would add garbage into the accumulator).
    wk_budget = _VMEM_BUDGET_BYTES // 4
    kt = K
    if K > 128 and 2 * K * H * 4 > wk_budget:
        cap = _round_down_mult(wk_budget // (2 * H * 4), 128)
        c = cap
        while c >= 128:
            if K % c == 0:
                kt = c
                break
            c -= 128
        # TODO(synk): if K has no 128-multiple divisor under the budget we
        # fall back to a single K block rather than masking a ragged K tile.

    # Row tile from the remaining budget:
    #   enc block (x2 buffers, f32) + keys out (x2, keys_dtype) + f32 acc.
    per_row = 2 * kt * 4 + 2 * H * keys_bytes + H * 4
    left = _VMEM_BUDGET_BYTES - 2 * kt * H * 4
    tr = _round_down_mult(max(left // per_row, 8), 8)
    tr = min(tr, 2048)
    if rows <= tr:
        tr = rows  # full extent -> exempt from the multiple-of-8 rule
    return tr, kt


def precompute_keys(encoder_outputs, wk, b_qk, *, keys_dtype=jnp.bfloat16):
    """key_layer(encoder_outputs) with the folded bias (bq + bk).

    encoder_outputs: (S, B, K) -> keys in batch-major (B, S, H), `keys_dtype`.
    Hidden-independent: cache the result across decode steps.  bf16 storage
    halves the HBM traffic of the per-step attention kernel.
    """
    S, B, K = encoder_outputs.shape
    H = wk.shape[1]
    rows = S * B

    # Free reshape on the native (S, B, K) layout — no HBM transpose pass.
    enc2d = encoder_outputs.reshape(rows, K)

    tr, kt = _key_proj_tiles(rows, K, H, jnp.dtype(keys_dtype).itemsize)

    keys2d = pl.pallas_call(
        _key_proj_kernel,
        out_shape=jax.ShapeDtypeStruct((rows, H), keys_dtype),
        grid=(pl.cdiv(rows, tr), pl.cdiv(K, kt)),
        in_specs=[
            pl.BlockSpec((tr, kt), lambda i, k: (i, k)),
            pl.BlockSpec((kt, H), lambda i, k: (k, 0)),
            pl.BlockSpec((1, H), lambda i, k: (0, 0)),
        ],
        out_specs=pl.BlockSpec((tr, H), lambda i, k: (i, 0)),
        scratch_shapes=[pltpu.VMEM((tr, H), jnp.float32)],
        compiler_params=pltpu.CompilerParams(
            dimension_semantics=("parallel", "arbitrary")),
    )(enc2d, wk, b_qk)

    # Transpose only the (much smaller, keys_dtype-width) keys output into
    # batch-major (B, S, H); this is one-time per encoder pass (cached).
    return jnp.transpose(keys2d.reshape(S, B, H), (1, 0, 2))


# --------------------------------------------------------------------------
# Kernel 2: per-step attention, gridded over batch tiles ("parallel").
#   e        = tanh(q[:,None,:] + keys)       (VPU add / EUP tanh)
#   energies = sum_h e * we_row               (VPU mul + XLU lane reduce, f32)
#   weights  = softmax(energies, axis=-1)     (Tb, S), lane-dense in S
# --------------------------------------------------------------------------
def _attention_kernel(q_ref, keys_ref, we_ref, out_ref, *, tanh_dtype):
    q = q_ref[...].astype(tanh_dtype)                         # (Tb, H)
    keys = keys_ref[...].astype(tanh_dtype)                   # (Tb, S, H)
    e = jnp.tanh(q[:, None, :] + keys)                        # (Tb, S, H)
    energies = jnp.sum(e.astype(jnp.float32) * we_ref[...], axis=-1)  # (Tb, S)
    m = jnp.max(energies, axis=-1, keepdims=True)
    ex = jnp.exp(energies - m)
    inv = pl.reciprocal(jnp.sum(ex, axis=-1, keepdims=True), approx=True)
    out_ref[...] = (ex * inv).astype(out_ref.dtype)           # (Tb, S)


def _attention_batch_tile(B, S, H, keys_bytes):
    # Per batch row: keys block (x2 buffers) + f32 tanh intermediate
    # + output (x2) + q.
    per_b = 2 * S * H * keys_bytes + S * H * 4 + 2 * S * 4 + H * 4
    tb = _round_down_mult(max(_VMEM_BUDGET_BYTES // per_b, 8), 8)
    if B <= tb:
        tb = B  # full extent -> exempt from the multiple-of-8 rule
    return tb


def attention_weights(q, keys, we_row, *, tanh_dtype=jnp.float32):
    """softmax_S( sum_h tanh(q + keys) * we ) -> (B, S).

    q: (B, H) f32 query projection (bias already folded into keys)
    keys: (B, S, H), typically bf16
    we_row: (1, H) f32
    tanh_dtype: jnp.bfloat16 roughly doubles EUP tanh throughput on v6e/v7x;
      keep jnp.float32 on v5e (no bf16 VPU/EUP) or for tighter tolerances.
    """
    B, S, H = keys.shape
    tb = _attention_batch_tile(B, S, H, jnp.dtype(keys.dtype).itemsize)
    kernel = functools.partial(_attention_kernel, tanh_dtype=tanh_dtype)
    # TODO(synk): for production decode shapes, pad S to a multiple of 128
    # (with masked softmax) so the output store is an unmasked vst, and
    # consider pipeline_mode=pl.Buffered(3) on the keys spec for v7x; at the
    # toy test shape this is pure overhead so it is left out.
    return pl.pallas_call(
        kernel,
        out_shape=jax.ShapeDtypeStruct((B, S), jnp.float32),
        grid=(pl.cdiv(B, tb),),
        in_specs=[
            pl.BlockSpec((tb, H), lambda i: (i, 0)),
            pl.BlockSpec((tb, S, H), lambda i: (i, 0, 0)),
            pl.BlockSpec((1, H), lambda i: (0, 0)),
        ],
        out_specs=pl.BlockSpec((tb, S), lambda i: (i, 0)),
        compiler_params=pltpu.CompilerParams(
            dimension_semantics=("parallel",)),
    )(q, keys, we_row)


def bahdanau_attention(hidden, encoder_outputs, wq, bq, wk, bk, we, be,
                       *, keys_dtype=jnp.bfloat16, tanh_dtype=jnp.float32):
    """Full forward of BahdanauAttentionQKV (no src_mask)."""
    del be  # uniform shift of all energies; cancels under softmax
    # Hidden-independent and cacheable across decode steps.
    keys = precompute_keys(encoder_outputs, wk, bq + bk, keys_dtype=keys_dtype)
    # Tiny (B, Q) @ (Q, H): keep it out of the gridded hot path.
    q = (hidden @ wq).astype(jnp.float32)
    return attention_weights(q, keys, we.reshape(1, -1), tanh_dtype=tanh_dtype)


# --------------------------------------------------------------------------
# Pure-JAX reference (matches the PyTorch forward semantics)
# --------------------------------------------------------------------------
def _reference(hidden, encoder_outputs, wq, bq, wk, bk, we, be):
    q = hidden @ wq + bq                                        # (B, H)
    k = jnp.einsum("sbk,kh->sbh", encoder_outputs, wk) + bk     # (S, B, H)
    e = jnp.tanh(q[None, :, :] + k)                             # (S, B, H)
    energies = jnp.einsum("sbh,hi->sbi", e, we)[..., 0] + be[0, 0]  # (S, B)
    w = jax.nn.softmax(energies, axis=0)                        # softmax over S
    return w.T                                                  # (B, S)


if __name__ == "__main__":
    # Module hyperparameters (defaults of BahdanauAttentionQKV)
    hidden_size = 32
    query_size = hidden_size          # default: hidden_size
    key_size = 2 * hidden_size        # default: 2 * hidden_size
    B, S = 2, 8

    key = jax.random.PRNGKey(0)
    k_hid, k_enc, k_wq, k_bq, k_wk, k_bk, k_we, k_be = jax.random.split(key, 8)

    hidden = jax.random.normal(k_hid, (B, query_size), dtype=jnp.float32)
    encoder_outputs = jax.random.normal(k_enc, (S, B, key_size), dtype=jnp.float32)

    # Deterministic parameter init (synthetic; weights stored as (in, out)).
    wq = 0.1 * jax.random.normal(k_wq, (query_size, hidden_size), dtype=jnp.float32)
    bq = 0.1 * jax.random.normal(k_bq, (1, hidden_size), dtype=jnp.float32)
    wk = 0.1 * jax.random.normal(k_wk, (key_size, hidden_size), dtype=jnp.float32)
    bk = 0.1 * jax.random.normal(k_bk, (1, hidden_size), dtype=jnp.float32)
    we = 0.1 * jax.random.normal(k_we, (hidden_size, 1), dtype=jnp.float32)
    be = 0.1 * jax.random.normal(k_be, (1, 1), dtype=jnp.float32)

    # TODO(synk): nn.Dropout is defined in __init__ but unused in forward; the
    # src_mask branch is not implemented (no-mask path only).
    out = bahdanau_attention(hidden, encoder_outputs, wq, bq, wk, bk, we, be)
    out = jax.block_until_ready(out)

    ref = _reference(hidden, encoder_outputs, wq, bq, wk, bk, we, be)
    # Tolerance reflects documented precision trade-offs: bf16-stored keys
    # (HBM-bandwidth optimization) and the approximate (EUP vrcp) softmax
    # reciprocal; weights are in [0, 1] and still sum to ~1 per row.
    np.testing.assert_allclose(np.asarray(out), np.asarray(ref),
                               rtol=2e-2, atol=5e-3)
    np.testing.assert_allclose(np.asarray(out).sum(axis=-1),
                               np.ones((B,), np.float32), atol=2e-3)

    print("KERNEL_OK")
</pallas_src>

<mosaic_0001>
module attributes {stable_mosaic.version = 11 : i64} {
  func.func @_key_proj_kernel(%arg0: i32, %arg1: i32, %arg2: memref<16x64xf32, #tpu.memory_space<vmem>>, %arg3: memref<64x32xf32, #tpu.memory_space<vmem>>, %arg4: memref<1x32xf32, #tpu.memory_space<vmem>>, %arg5: memref<16x32xbf16, #tpu.memory_space<vmem>>, %arg6: memref<16x32xf32, #tpu.memory_space<vmem>>) attributes {dimension_semantics = [#tpu.dimension_semantics<parallel>, #tpu.dimension_semantics<arbitrary>], iteration_bounds = array<i64: 1, 1>, scalar_prefetch = 0 : i64, scratch_operands = 1 : i64, tpu.core_type = #tpu.core_type<tc>, window_params = [{transform_indices = @transform_0, window_bounds = array<i64: 16, 64>}, {transform_indices = @transform_1, window_bounds = array<i64: 64, 32>}, {pipeline_mode = #tpu.pipeline_mode<synchronous>, transform_indices = @transform_2, window_bounds = array<i64: 1, 32>}, {transform_indices = @transform_3, window_bounds = array<i64: 16, 32>}]} {
    %c0_i32 = arith.constant 0 : i32
    %0 = arith.cmpi eq, %arg1, %c0_i32 : i32
    %1 = arith.extui %0 : i1 to i32
    %c0_i32_0 = arith.constant 0 : i32
    %2 = arith.cmpi ne, %1, %c0_i32_0 : i32
    scf.if %2 {
      %cst_10 = arith.constant 0.000000e+00 : f32
      %12 = vector.broadcast %cst_10 : f32 to vector<16x32xf32>
      %c0_11 = arith.constant 0 : index
      %c0_12 = arith.constant 0 : index
      %13 = vector.load %arg6[%c0_11, %c0_12] : memref<16x32xf32, #tpu.memory_space<vmem>>, vector<16x32xf32>
      tpu.vector_store %arg6[%c0_11, %c0_12], %12 {strides = array<i32>} : memref<16x32xf32, #tpu.memory_space<vmem>>, vector<16x32xf32>,
    } else {
    }
    %c0 = arith.constant 0 : index
    %c0_1 = arith.constant 0 : index
    %3 = vector.load %arg6[%c0, %c0_1] : memref<16x32xf32, #tpu.memory_space<vmem>>, vector<16x32xf32>
    %c0_2 = arith.constant 0 : index
    %c0_3 = arith.constant 0 : index
    %4 = vector.load %arg2[%c0_2, %c0_3] : memref<16x64xf32, #tpu.memory_space<vmem>>, vector<16x64xf32>
    %c0_4 = arith.constant 0 : index
    %c0_5 = arith.constant 0 : index
    %5 = vector.load %arg3[%c0_4, %c0_5] : memref<64x32xf32, #tpu.memory_space<vmem>>, vector<64x32xf32>
    %cst = arith.constant dense<0.000000e+00> : vector<16x32xf32>
    %6 = tpu.matmul %4, %5, %cst {dimension_numbers = #tpu.dot_dimension_numbers<[1], [0], [0], [1], [0, 0, 1, 1], [], []>} : vector<16x64xf32>, vector<64x32xf32>, vector<16x32xf32> -> vector<16x32xf32>
    %7 = arith.addf %3, %6 : vector<16x32xf32>
    %c0_6 = arith.constant 0 : index
    %c0_7 = arith.constant 0 : index
    %8 = vector.load %arg6[%c0_6, %c0_7] : memref<16x32xf32, #tpu.memory_space<vmem>>, vector<16x32xf32>
    tpu.vector_store %arg6[%c0_6, %c0_7], %7 {strides = array<i32>} : memref<16x32xf32, #tpu.memory_space<vmem>>, vector<16x32xf32>,
    %c0_i32_8 = arith.constant 0 : i32
    %9 = arith.cmpi eq, %arg1, %c0_i32_8 : i32
    %10 = arith.extui %9 : i1 to i32
    %c0_i32_9 = arith.constant 0 : i32
    %11 = arith.cmpi ne, %10, %c0_i32_9 : i32
    scf.if %11 {
      %c0_10 = arith.constant 0 : index
      %c0_11 = arith.constant 0 : index
      %12 = vector.load %arg6[%c0_10, %c0_11] : memref<16x32xf32, #tpu.memory_space<vmem>>, vector<16x32xf32>
      %c0_12 = arith.constant 0 : index
      %c0_13 = arith.constant 0 : index
      %13 = vector.load %arg4[%c0_12, %c0_13] : memref<1x32xf32, #tpu.memory_space<vmem>>, vector<1x32xf32>
      %14 = vector.broadcast %13 : vector<1x32xf32> to vector<16x32xf32>
      %15 = arith.addf %12, %14 : vector<16x32xf32>
      %16 = arith.truncf %15 : vector<16x32xf32> to vector<16x32xbf16>
      %c0_14 = arith.constant 0 : index
      %c0_15 = arith.constant 0 : index
      %17 = vector.load %arg5[%c0_14, %c0_15] : memref<16x32xbf16, #tpu.memory_space<vmem>>, vector<16x32xbf16>
      tpu.vector_store %arg5[%c0_14, %c0_15], %16 {strides = array<i32>} : memref<16x32xbf16, #tpu.memory_space<vmem>>, vector<16x32xbf16>,
    } else {
    }
    return
  }
  func.func @transform_0(%arg0: i32, %arg1: i32) -> (i32, i32) {
    %c0_i32 = arith.constant 0 : i32
    return %arg0, %arg1 : i32, i32
  }
  func.func @transform_1(%arg0: i32, %arg1: i32) -> (i32, i32) {
    %c0_i32 = arith.constant 0 : i32
    %c0_i32_0 = arith.constant 0 : i32
    return %arg1, %c0_i32 : i32, i32
  }
  func.func @transform_2(%arg0: i32, %arg1: i32) -> (i32, i32) {
    %c0_i32 = arith.constant 0 : i32
    %c0_i32_0 = arith.constant 0 : i32
    %c0_i32_1 = arith.constant 0 : i32
    return %c0_i32, %c0_i32_0 : i32, i32
  }
  func.func @transform_3(%arg0: i32, %arg1: i32) -> (i32, i32) {
    %c0_i32 = arith.constant 0 : i32
    %c0_i32_0 = arith.constant 0 : i32
    return %arg0, %c0_i32 : i32, i32
  }
}

</mosaic_0001>

<llo_original>
// kernel: tpu_custom_call.1
$region0: #{tpu_custom_call.1}
  #allocation0 [shape = 'u32[]', space=smem, size = 0x4, offset = 0x4, fixed_abs, tag = 'smem constant byte address 0x4 - core index']
  #allocation1 [shape = 'u32[144,128]{1,0:T(1,128)}', space=vmem, size = 0x12000, scoped, tag = 'internal scratch']
  #allocation2 [shape = 'f32[16,32]{1,0:T(8,128)}', space=vmem, size = 0x2000, scoped, tag = 'scratch operand']
  %s0 = inlined_call_operand.vmem [shape: f32[16,64], index: 0, kind: input, shape index: {}]
  %s1 = inlined_call_operand.vmem [shape: f32[64,32], index: 1, kind: input, shape index: {}]
  %s2 = inlined_call_operand.vmem [shape: f32[1,32], index: 2, kind: input, shape index: {}]
  %s3 = inlined_call_operand.hbm [shape: bf16[16,32], index: 3, kind: output, shape index: {}]
  %s4 = sld [smem:[#allocation0]]
  $region30: #{tpu_custom_call.1} parent=0
    _
  %s6 = ssub.s32 1, %s4
  %s7 = scalar_select 0, %s6, %s4
  $region1: #{tpu_custom_call.1} parent=0
    #allocation3 [shape = 'u8[4096]{0}', space=vmem, size = 0x1000, scoped, tag = 'output window, operand 0, single buffered']
    #allocation4 [shape = 's32[1]{0}', space=sflag, size = 0x4, scoped, tag = 'scoped memory for tpu_custom_call.1']
    %8 = vsyncpa [#allocation4], 0
    // Predicated region
    $region2: #{tpu_custom_call.1} parent=1 // pred_check
      _
    $region3: #{tpu_custom_call.1} parent=1 // pred_check_branch
      %10 = sbr.rel (0) target = $region5
    $region4: #{tpu_custom_call.1} parent=1 // pred_region
      _
    $region5: #{tpu_custom_call.1} parent=1 // pred_fallthru
      _
    // Predicated region
    $region6: #{tpu_custom_call.1} parent=1 // pred_check
      _
    $region7: #{tpu_custom_call.1} parent=1 // pred_check_branch
      %12 = sbr.rel (0) target = $region9
    $region8: #{tpu_custom_call.1} parent=1 // pred_region
      _
    $region9: #{tpu_custom_call.1} parent=1 // pred_fallthru
      _
    // Predicated region
    $region10: #{tpu_custom_call.1} parent=1 // pred_check
      _
    $region11: #{tpu_custom_call.1} parent=1 // pred_check_branch
      %14 = sbr.rel (0) target = $region13
    $region12: #{tpu_custom_call.1} parent=1 // pred_region
      _
    $region13: #{tpu_custom_call.1} parent=1 // pred_fallthru
      _
    %p15 = scmp.eq.s32.totalorder 0, 0
    // Predicated region
    $region14: #{tpu_custom_call.1} parent=1 // pred_check
      %p16 = pneg %p15
    $region15: #{tpu_custom_call.1} parent=1 // pred_check_branch
      %18 = sbr.rel (%p16) target = $region17
    $region16: #{tpu_custom_call.1} parent=1 // pred_region
      %vm19 = vcmask 261120
      %20 = vst.msk [vmem:[#allocation2] sm:$0xff] %vm19, 0.0
      %21 = vst.msk [vmem:[#allocation2 + $0x8] sm:$0xff] %vm19, 0.0
    $region17: #{tpu_custom_call.1} parent=1 // pred_fallthru
      _
    %v22 = vld [vmem:[#allocation2] sm:$0xff]
    %v23 = vld [vmem:[#allocation2 + $0x8] sm:$0xff]
    %v24 = vld [vmem:[%s0] sm:$0xff]
    %v25 = vld [vmem:[%s0 + $0x8] sm:$0xff]
    %v26 = vld [vmem:[%s1] sm:$0xff]
    %v27 = vld [vmem:[%s1 + $0x8] sm:$0xff]
    %v28 = vld [vmem:[%s1 + $0x10] sm:$0xff]
    %v29 = vld [vmem:[%s1 + $0x18] sm:$0xff]
    %v30 = vld [vmem:[%s1 + $0x20] sm:$0xff]
    %v31 = vld [vmem:[%s1 + $0x28] sm:$0xff]
    %v32 = vld [vmem:[%s1 + $0x30] sm:$0xff]
    %v33 = vld [vmem:[%s1 + $0x38] sm:$0xff]
    %vm34 = vcmask 523264
    %v36 = vsel %vm34, %v24, 0
    %v39 = vsel %vm34, %v25, 0
    %41 = vmatprep.subr.mxu0 0.0
    %42 = vmatpush1.msra.mxu0 0.0
    %43 = vmatprep.subr.mxu0 0.0
    %44 = vmatpush1.msra.mxu0 0.0
    %45 = vmatprep.subr.mxu0 0.0
    %46 = vmatpush1.msra.mxu0 0.0
    %47 = vmatprep.subr.mxu0 0.0
    %48 = vmatpush1.msra.mxu0 0.0
    %49 = vmatprep.subr.mxu0 0.0
    %50 = vmatpush1.msra.mxu0 0.0
    %51 = vmatprep.subr.mxu0 0.0
    %52 = vmatpush1.msra.mxu0 0.0
    %53 = vmatprep.subr.mxu0 0.0
    %54 = vmatpush1.msra.mxu0 0.0
    %55 = vmatprep.subr.mxu0 0.0
    %56 = vmatpush1.msra.mxu0 0.0
    %57 = vmatprep.subr.mxu0 0.0
    %58 = vmatpush1.msra.mxu0 %v33
    %59 = vmatprep.subr.mxu0 0.0
    %60 = vmatpush1.msra.mxu0 %v32
    %61 = vmatprep.subr.mxu0 0.0
    %62 = vmatpush1.msra.mxu0 %v31
    %63 = vmatprep.subr.mxu0 0.0
    %64 = vmatpush1.msra.mxu0 %v30
    %65 = vmatprep.subr.mxu0 0.0
    %66 = vmatpush1.msra.mxu0 %v29
    %67 = vmatprep.subr.mxu0 0.0
    %68 = vmatpush1.msra.mxu0 %v28
    %69 = vmatprep.subr.mxu0 0.0
    %70 = vmatpush1.msra.mxu0 %v27
    %71 = vmatprep.subr.mxu0 0.0
    %72 = vmatpush1.msra.mxu0 %v26
    %73 = vmatprep.subr.mxu0 0.0
    %74 = vmatpush2.msra.mxu0 0.0
    %75 = vmatprep.subr.mxu0 0.0
    %76 = vmatpush2.msra.mxu0 0.0
    %77 = vmatprep.subr.mxu0 0.0
    %78 = vmatpush2.msra.mxu0 0.0
    %79 = vmatprep.subr.mxu0 0.0
    %80 = vmatpush2.msra.mxu0 0.0
    %81 = vmatprep.subr.mxu0 0.0
    %82 = vmatpush2.msra.mxu0 0.0
    %83 = vmatprep.subr.mxu0 0.0
    %84 = vmatpush2.msra.mxu0 0.0
    %85 = vmatprep.subr.mxu0 0.0
    %86 = vmatpush2.msra.mxu0 0.0
    %87 = vmatprep.subr.mxu0 0.0
    %88 = vmatpush2.msra.mxu0 0.0
    %89 = vmatprep.subr.mxu0 0.0
    %90 = vmatpush2.msra.mxu0 0.0
    %91 = vmatprep.subr.mxu0 0.0
    %92 = vmatpush2.msra.mxu0 0.0
    %93 = vmatprep.subr.mxu0 0.0
    %94 = vmatpush2.msra.mxu0 0.0
    %95 = vmatprep.subr.mxu0 0.0
    %96 = vmatpush2.msra.mxu0 0.0
    %97 = vmatprep.subr.mxu0 0.0
    %98 = vmatpush2.msra.mxu0 0.0
    %99 = vmatprep.subr.mxu0 0.0
    %100 = vmatpush2.msra.mxu0 0.0
    %101 = vmatprep.subr.mxu0 0.0
    %102 = vmatpush2.msra.mxu0 0.0
    %103 = vmatprep.subr.mxu0 0.0
    %104 = vmatpush2.msra.mxu0 0.0
    %105 = vmatprep.mubr.f32.mxu0 0.0
    %106 = vmatmul.mubr.f32.gmra.mxu0 %v36
    %v107 = vpop.f32.mrf.mxu0
    %v108 = vadd.f32 0.0, %v107
    %v109 = vpop.f32.mrf.mxu0
    %110 = vmatprep.mubr.f32.mxu0 0.0
    %111 = vmatmul.mubr.f32.gmra.mxu0 %v39
    %v112 = vpop.f32.mrf.mxu0
    %v113 = vadd.f32 0.0, %v112
    %v114 = vpop.f32.mrf.mxu0
    %115 = vdwg.mxu0
    %v116 = vadd.f32 %v22, %v108
    %v117 = vadd.f32 %v23, %v113
    %vm118 = vcmask 261120
    %119 = vst.msk [vmem:[#allocation2] sm:$0xff] %vm118, %v116
    %120 = vst.msk [vmem:[#allocation2 + $0x8] sm:$0xff] %vm118, %v117
    // Predicated region
    $region18: #{tpu_custom_call.1} parent=1 // pred_check
      %p121 = pneg %p15
    $region19: #{tpu_custom_call.1} parent=1 // pred_check_branch
      %123 = sbr.rel (%p121) target = $region21
    $region20: #{tpu_custom_call.1} parent=1 // pred_region
      %v124 = vld [vmem:[#allocation2] sm:$0xff]
      %v125 = vld [vmem:[#allocation2 + $0x8] sm:$0xff]
      %v126 = vld [vmem:[%s2] sm:$0x1]
      %v128 = vlaneseq
      %v129 = vshrl.u32 %v128, 7
      %v130 = vsub.s32 0, %v129
      %v131 = vrot.slane %v126, %v130
      %v133 = vadd.f32 %v124, %v131
      %v134 = vadd.f32 %v125, %v131
      %v135 = vpack.c.bf16 %v134, %v133
      %v137 = vunpack.c.l.b16 %v135
      %v138 = vunpack.c.h.b16 %v135
      %v139 = vpack.c.b16 %v137, %v137
      %v140 = vpack.c.b16 %v138, %v138
      %vm143 = vcmask 257024
      %144 = vst.msk [vmem:[#allocation3] sm:$0xf] %vm143, %v139
      %145 = vst.msk [vmem:[#allocation3 + $0x4] sm:$0xf] %vm143, %v140
    $region21: #{tpu_custom_call.1} parent=1 // pred_fallthru
      _
    // Predicated region
    $region22: #{tpu_custom_call.1} parent=1 // pred_check
      _
    $region23: #{tpu_custom_call.1} parent=1 // pred_check_branch
      %147 = sbr.rel (0) target = $region25
    $region24: #{tpu_custom_call.1} parent=1 // pred_region
      %s149 = ssub.s32 128, 128
      %150 = vsyncadd [#allocation4], %s149
      %s151 = sshll.u32 [#allocation3], 4
      %s152 = int_to_ptr.vmem [resolvable:$true] %s151
      %157 = dma.vmem_to_hbm [thread:$0]  %s152, 128, %s3, [#allocation4], 64, 64, 4
    $region25: #{tpu_custom_call.1} parent=1 // pred_fallthru
      _
    // Predicated region
    $region26: #{tpu_custom_call.1} parent=1 // pred_check
      _
    $region27: #{tpu_custom_call.1} parent=1 // pred_check_branch
      %159 = sbr.rel (0) target = $region29
    $region28: #{tpu_custom_call.1} parent=1 // pred_region
      %160 = dma.done [#allocation4], 128
    $region29: #{tpu_custom_call.1} parent=1 // pred_fallthru
      _
    %161 = vsyncpa [#allocation4], 1

</llo_original>
